<compile_context>
chip_gen: v7x
topology: tpu7x:2x2x1
jax: 0.10.0
libtpu: 0.0.40
codegen_flags: <defaults>
</compile_context>

<pallas_src>
import functools

import jax
import jax.numpy as jnp
from jax.experimental import pallas as pl
from jax.experimental.pallas import tpu as pltpu

PAD_IDX = 0


def _encoder_tanh_kernel(xc_ref, w1_ref, b1_ref, w2_ref, b2_ref,
                         wc_ref, bc_ref, wg1_ref, bg1_ref, wg2_ref, bg2_ref,
                         out_ref, *, K, P, S, H, Bt):
    n = Bt * S

    # ---- conv1 + ReLU: one im2col matmul (Bt*S, K*E) @ (K*E, H) ----
    h1 = jnp.maximum(
        jnp.dot(xc_ref[...], w1_ref[...], preferred_element_type=jnp.float32)
        + b1_ref[...], 0.0)                                    # (Bt*S, H) f32

    # ---- conv2 + ReLU: im2col built in registers (no VMEM scratch) ----
    # shifted_d[r, :] = h1[r + d, :] if row r+d is inside the same sequence,
    # else 0 ("same" padding).  Static rolls + VPU masks; stacked on lanes.
    pos = jax.lax.broadcasted_iota(jnp.int32, (n, H), 0) % S   # within-seq idx
    pieces = []
    for k in range(K):
        d = k - P
        if d == 0:
            pieces.append(h1)
        else:
            rolled = jnp.roll(h1, -d, axis=0)                  # rolled[r] = h1[r+d]
            valid = jnp.logical_and(pos + d >= 0, pos + d < S)
            pieces.append(jnp.where(valid, rolled, 0.0))
    cols2 = jnp.concatenate(pieces, axis=-1).astype(jnp.bfloat16)   # (Bt*S, K*H)
    h2 = jnp.maximum(
        jnp.dot(cols2, w2_ref[...], preferred_element_type=jnp.float32)
        + b2_ref[...], 0.0)                                    # (Bt*S, H) f32

    # ---- cpr_linear over the sequence dim on VPU/XLU, tanh on EUP ----
    h2w = h2.reshape(Bt, S, H) * wc_ref[...][None, :, :]       # (Bt, S, H)
    ctx = jnp.tanh(jnp.sum(h2w, axis=1) + bc_ref[...])         # (Bt, H)

    # ---- gen_ctx: Linear -> ReLU -> Dropout(identity, eval) -> Linear ----
    g = jnp.maximum(
        jnp.dot(ctx.astype(jnp.bfloat16), wg1_ref[...],
                preferred_element_type=jnp.float32) + bg1_ref[...], 0.0)
    out_ref[...] = (
        jnp.dot(g.astype(jnp.bfloat16), wg2_ref[...],
                preferred_element_type=jnp.float32) + bg2_ref[...])


def encoder_tanh_forward(tokens, lengths, params, *, kernel_size, batch_tile=8):
    """tokens: (B, S) int32.  lengths is unused (as in the PyTorch forward)."""
    del lengths
    B, S = tokens.shape
    emb_table = params["embed"]                       # (V, E)
    E = emb_table.shape[1]
    H = params["b1"].shape[0]
    K = kernel_size
    P = K // 2

    Bt = batch_tile
    nb = pl.cdiv(B, Bt)
    B_pad = nb * Bt

    # Glue in plain JAX: embedding gather, batch-tile padding, conv1 im2col.
    emb = jnp.take(emb_table, tokens, axis=0)         # (B, S, E)
    if B_pad != B:
        emb = jnp.pad(emb, ((0, B_pad - B), (0, 0), (0, 0)))
    xp = jnp.pad(emb, ((0, 0), (P, P), (0, 0)))       # (B_pad, S+2P, E)
    x_cols = jnp.concatenate([xp[:, k:k + S, :] for k in range(K)], axis=-1)
    x_cols = x_cols.reshape(B_pad * S, K * E).astype(jnp.bfloat16)

    # MXU operands in bf16 (f32 accumulation in-kernel); biases stay f32.
    w1c = jnp.transpose(params["w1"], (2, 1, 0)).reshape(K * E, H).astype(jnp.bfloat16)
    w2c = jnp.transpose(params["w2"], (2, 1, 0)).reshape(K * H, H).astype(jnp.bfloat16)
    b1 = params["b1"].reshape(1, H).astype(jnp.float32)
    b2 = params["b2"].reshape(1, H).astype(jnp.float32)
    wc = params["wc"].reshape(S, 1).astype(jnp.float32)   # seq weights as a column
    bc = params["bc"].reshape(1, 1).astype(jnp.float32)
    wg1 = params["wg1"].T.astype(jnp.bfloat16)            # y = x @ W^T
    bg1 = params["bg1"].reshape(1, H).astype(jnp.float32)
    wg2 = params["wg2"].T.astype(jnp.bfloat16)
    bg2 = params["bg2"].reshape(1, H).astype(jnp.float32)

    kernel = functools.partial(_encoder_tanh_kernel, K=K, P=P, S=S, H=H, Bt=Bt)
    const = lambda b: (0, 0)

    out = pl.pallas_call(
        kernel,
        out_shape=jax.ShapeDtypeStruct((B_pad, H), jnp.float32),
        grid_spec=pltpu.PrefetchScalarGridSpec(
            num_scalar_prefetch=0,
            grid=(nb,),
            in_specs=[
                pl.BlockSpec((Bt * S, K * E), lambda b: (b, 0)),  # im2col activations
                pl.BlockSpec((K * E, H), const),                  # conv1 weight (im2col)
                pl.BlockSpec((1, H), const),                      # conv1 bias
                pl.BlockSpec((K * H, H), const),                  # conv2 weight (im2col)
                pl.BlockSpec((1, H), const),                      # conv2 bias
                pl.BlockSpec((S, 1), const),                      # cpr_linear weight
                pl.BlockSpec((1, 1), const),                      # cpr_linear bias
                pl.BlockSpec((H, H), const),                      # gen_ctx W1^T
                pl.BlockSpec((1, H), const),                      # gen_ctx b1
                pl.BlockSpec((H, H), const),                      # gen_ctx W2^T
                pl.BlockSpec((1, H), const),                      # gen_ctx b2
            ],
            out_specs=pl.BlockSpec((Bt, H), lambda b: (b, 0)),
        ),
        compiler_params=pltpu.CompilerParams(
            dimension_semantics=("parallel",)),
    )(x_cols, w1c, b1, w2c, b2, wc, bc, wg1, bg1, wg2, bg2)

    # .unsqueeze(0) -> (1, B, H); use_attn=False path returns only the context.
    return out[:B][None, :, :]


def _reference(tokens, params, *, kernel_size):
    """Pure-JAX f32 reference mirroring the PyTorch forward (eval mode)."""
    P = kernel_size // 2
    emb = jnp.take(params["embed"], tokens, axis=0)           # (B, S, E)
    x = jnp.transpose(emb, (0, 2, 1))                         # (B, E, S)

    def conv1d(x, w, b):
        y = jax.lax.conv_general_dilated(
            x, w, window_strides=(1,), padding=[(P, P)],
            dimension_numbers=("NCH", "OIH", "NCH"))
        return y + b[None, :, None]

    h1 = jax.nn.relu(conv1d(x, params["w1"], params["b1"]))
    h2 = jax.nn.relu(conv1d(h1, params["w2"], params["b2"]))
    ctx = jnp.tanh(jnp.einsum("bhs,s->bh", h2, params["wc"][0]) + params["bc"])
    g = jax.nn.relu(ctx @ params["wg1"].T + params["bg1"])
    out = g @ params["wg2"].T + params["bg2"]
    return out[None]


def init_params(key, vocab_size, emb_size, hidden_size, kernel_size, seq_len):
    ks = jax.random.split(key, 10)
    scale = 0.1
    embed = scale * jax.random.normal(ks[0], (vocab_size, emb_size), jnp.float32)
    embed = embed.at[PAD_IDX].set(0.0)  # padding_idx row is zero
    return {
        "embed": embed,
        "w1": scale * jax.random.normal(ks[1], (hidden_size, emb_size, kernel_size), jnp.float32),
        "b1": scale * jax.random.normal(ks[2], (hidden_size,), jnp.float32),
        "w2": scale * jax.random.normal(ks[3], (hidden_size, hidden_size, kernel_size), jnp.float32),
        "b2": scale * jax.random.normal(ks[4], (hidden_size,), jnp.float32),
        "wc": scale * jax.random.normal(ks[5], (1, seq_len), jnp.float32),
        "bc": scale * jax.random.normal(ks[6], (1,), jnp.float32),
        "wg1": scale * jax.random.normal(ks[7], (hidden_size, hidden_size), jnp.float32),
        "bg1": jnp.zeros((hidden_size,), jnp.float32),
        "wg2": scale * jax.random.normal(ks[8], (hidden_size, hidden_size), jnp.float32),
        "bg2": jnp.zeros((hidden_size,), jnp.float32),
    }


if __name__ == "__main__":
    # Small, module-consistent shapes (B is padded up to the batch tile inside).
    B, S = 2, 8
    VOCAB, EMB, HID, KSZ = 16, 32, 32, 3

    key = jax.random.PRNGKey(0)
    pkey, tkey = jax.random.split(key)
    params = init_params(pkey, VOCAB, EMB, HID, KSZ, S)
    tokens = jax.random.randint(tkey, (B, S), 0, VOCAB, dtype=jnp.int32)
    lengths = jnp.full((B,), S, jnp.int32)

    out = encoder_tanh_forward(tokens, lengths, params, kernel_size=KSZ)
    out = jax.block_until_ready(out)

    ref = jax.block_until_ready(_reference(tokens, params, kernel_size=KSZ))
    assert out.shape == (1, B, HID), out.shape
    max_err = float(jnp.max(jnp.abs(out - ref)))
    # bf16 MXU operands with f32 accumulation vs. an all-f32 reference.
    assert jnp.allclose(out, ref, rtol=2e-2, atol=2e-2), max_err

    print("KERNEL_OK")
</pallas_src>

<mosaic_0001>
module attributes {stable_mosaic.version = 11 : i64} {
  func.func @_encoder_tanh_kernel(%arg0: i32, %arg1: memref<64x96xbf16, #tpu.memory_space<vmem>>, %arg2: memref<96x32xbf16, #tpu.memory_space<vmem>>, %arg3: memref<1x32xf32, #tpu.memory_space<vmem>>, %arg4: memref<96x32xbf16, #tpu.memory_space<vmem>>, %arg5: memref<1x32xf32, #tpu.memory_space<vmem>>, %arg6: memref<8x1xf32, #tpu.memory_space<vmem>>, %arg7: memref<1x1xf32, #tpu.memory_space<vmem>>, %arg8: memref<32x32xbf16, #tpu.memory_space<vmem>>, %arg9: memref<1x32xf32, #tpu.memory_space<vmem>>, %arg10: memref<32x32xbf16, #tpu.memory_space<vmem>>, %arg11: memref<1x32xf32, #tpu.memory_space<vmem>>, %arg12: memref<8x32xf32, #tpu.memory_space<vmem>>) attributes {dimension_semantics = [#tpu.dimension_semantics<parallel>], iteration_bounds = array<i64: 1>, scalar_prefetch = 0 : i64, scratch_operands = 0 : i64, tpu.core_type = #tpu.core_type<tc>, window_params = [{transform_indices = @transform_0, window_bounds = array<i64: 64, 96>}, {pipeline_mode = #tpu.pipeline_mode<synchronous>, transform_indices = @transform_1, window_bounds = array<i64: 96, 32>}, {pipeline_mode = #tpu.pipeline_mode<synchronous>, transform_indices = @transform_2, window_bounds = array<i64: 1, 32>}, {pipeline_mode = #tpu.pipeline_mode<synchronous>, transform_indices = @transform_3, window_bounds = array<i64: 96, 32>}, {pipeline_mode = #tpu.pipeline_mode<synchronous>, transform_indices = @transform_4, window_bounds = array<i64: 1, 32>}, {pipeline_mode = #tpu.pipeline_mode<synchronous>, transform_indices = @transform_5, window_bounds = array<i64: 8, 1>}, {pipeline_mode = #tpu.pipeline_mode<synchronous>, transform_indices = @transform_6, window_bounds = array<i64: 1, 1>}, {pipeline_mode = #tpu.pipeline_mode<synchronous>, transform_indices = @transform_7, window_bounds = array<i64: 32, 32>}, {pipeline_mode = #tpu.pipeline_mode<synchronous>, transform_indices = @transform_8, window_bounds = array<i64: 1, 32>}, {pipeline_mode = #tpu.pipeline_mode<synchronous>, transform_indices = @transform_9, window_bounds = array<i64: 32, 32>}, {pipeline_mode = #tpu.pipeline_mode<synchronous>, transform_indices = @transform_10, window_bounds = array<i64: 1, 32>}, {transform_indices = @transform_11, window_bounds = array<i64: 8, 32>}]} {
    %c0 = arith.constant 0 : index
    %c0_0 = arith.constant 0 : index
    %0 = vector.load %arg1[%c0, %c0_0] : memref<64x96xbf16, #tpu.memory_space<vmem>>, vector<64x96xbf16>
    %c0_1 = arith.constant 0 : index
    %c0_2 = arith.constant 0 : index
    %1 = vector.load %arg2[%c0_1, %c0_2] : memref<96x32xbf16, #tpu.memory_space<vmem>>, vector<96x32xbf16>
    %cst = arith.constant dense<0.000000e+00> : vector<64x32xf32>
    %2 = tpu.matmul %0, %1, %cst {dimension_numbers = #tpu.dot_dimension_numbers<[1], [0], [0], [1], [0, 0, 1, 1], [], []>} : vector<64x96xbf16>, vector<96x32xbf16>, vector<64x32xf32> -> vector<64x32xf32>
    %c0_3 = arith.constant 0 : index
    %c0_4 = arith.constant 0 : index
    %3 = vector.load %arg3[%c0_3, %c0_4] : memref<1x32xf32, #tpu.memory_space<vmem>>, vector<1x32xf32>
    %4 = vector.broadcast %3 : vector<1x32xf32> to vector<64x32xf32>
    %5 = arith.addf %2, %4 : vector<64x32xf32>
    %cst_5 = arith.constant 0.000000e+00 : f32
    %6 = vector.broadcast %cst_5 : f32 to vector<64x32xf32>
    %7 = arith.maximumf %5, %6 : vector<64x32xf32>
    %8 = tpu.iota {dimensions = array<i32: 0>} : vector<64x32xi32>
    %c8_i32 = arith.constant 8 : i32
    %c0_i32 = arith.constant 0 : i32
    %9 = arith.cmpi eq, %c8_i32, %c0_i32 : i32
    %c1_i32 = arith.constant 1 : i32
    %10 = arith.select %9, %c1_i32, %c8_i32 : i32
    %11 = vector.broadcast %10 : i32 to vector<64x32xi32>
    %12 = arith.remsi %8, %11 : vector<64x32xi32>
    %c0_i32_6 = arith.constant 0 : i32
    %13 = vector.broadcast %c0_i32_6 : i32 to vector<64x32xi32>
    %14 = arith.cmpi ne, %12, %13 : vector<64x32xi32>
    %c0_i32_7 = arith.constant 0 : i32
    %15 = vector.broadcast %c0_i32_7 : i32 to vector<64x32xi32>
    %16 = arith.cmpi slt, %12, %15 : vector<64x32xi32>
    %c0_i32_8 = arith.constant 0 : i32
    %17 = arith.cmpi slt, %10, %c0_i32_8 : i32
    %18 = vector.broadcast %17 : i1 to vector<64x32xi1>
    %19 = vector.broadcast %18 : vector<64x32xi1> to vector<64x32xi1>
    %20 = arith.xori %16, %19 : vector<64x32xi1>
    %21 = arith.andi %20, %14 : vector<64x32xi1>
    %22 = vector.broadcast %10 : i32 to vector<64x32xi32>
    %23 = arith.addi %12, %22 : vector<64x32xi32>
    %24 = arith.select %21, %23, %12 : vector<64x32xi1>, vector<64x32xi32>
    %25 = vector.extract_strided_slice %7 {offsets = [63, 0], sizes = [1, 32], strides = [1, 1]} : vector<64x32xf32> to vector<1x32xf32>
    %26 = vector.extract_strided_slice %7 {offsets = [0, 0], sizes = [63, 32], strides = [1, 1]} : vector<64x32xf32> to vector<63x32xf32>
    %27 = tpu.concatenate %25, %26 in 0 : vector<1x32xf32>, vector<63x32xf32> -> vector<64x32xf32>
    %c-1_i32 = arith.constant -1 : i32
    %28 = vector.broadcast %c-1_i32 : i32 to vector<64x32xi32>
    %29 = arith.addi %24, %28 : vector<64x32xi32>
    %c0_i32_9 = arith.constant 0 : i32
    %30 = vector.broadcast %c0_i32_9 : i32 to vector<64x32xi32>
    %31 = arith.cmpi sge, %29, %30 : vector<64x32xi32>
    %c-1_i32_10 = arith.constant -1 : i32
    %32 = vector.broadcast %c-1_i32_10 : i32 to vector<64x32xi32>
    %33 = arith.addi %24, %32 : vector<64x32xi32>
    %c8_i32_11 = arith.constant 8 : i32
    %34 = vector.broadcast %c8_i32_11 : i32 to vector<64x32xi32>
    %35 = arith.cmpi slt, %33, %34 : vector<64x32xi32>
    %36 = arith.andi %31, %35 : vector<64x32xi1>
    %cst_12 = arith.constant 0.000000e+00 : f32
    %37 = vector.broadcast %cst_12 : f32 to vector<64x32xf32>
    %38 = arith.select %36, %27, %37 : vector<64x32xi1>, vector<64x32xf32>
    %39 = vector.extract_strided_slice %7 {offsets = [1, 0], sizes = [63, 32], strides = [1, 1]} : vector<64x32xf32> to vector<63x32xf32>
    %40 = vector.extract_strided_slice %7 {offsets = [0, 0], sizes = [1, 32], strides = [1, 1]} : vector<64x32xf32> to vector<1x32xf32>
    %41 = tpu.concatenate %39, %40 in 0 : vector<63x32xf32>, vector<1x32xf32> -> vector<64x32xf32>
    %c1_i32_13 = arith.constant 1 : i32
    %42 = vector.broadcast %c1_i32_13 : i32 to vector<64x32xi32>
    %43 = arith.addi %24, %42 : vector<64x32xi32>
    %c0_i32_14 = arith.constant 0 : i32
    %44 = vector.broadcast %c0_i32_14 : i32 to vector<64x32xi32>
    %45 = arith.cmpi sge, %43, %44 : vector<64x32xi32>
    %c1_i32_15 = arith.constant 1 : i32
    %46 = vector.broadcast %c1_i32_15 : i32 to vector<64x32xi32>
    %47 = arith.addi %24, %46 : vector<64x32xi32>
    %c8_i32_16 = arith.constant 8 : i32
    %48 = vector.broadcast %c8_i32_16 : i32 to vector<64x32xi32>
    %49 = arith.cmpi slt, %47, %48 : vector<64x32xi32>
    %50 = arith.andi %45, %49 : vector<64x32xi1>
    %cst_17 = arith.constant 0.000000e+00 : f32
    %51 = vector.broadcast %cst_17 : f32 to vector<64x32xf32>
    %52 = arith.select %50, %41, %51 : vector<64x32xi1>, vector<64x32xf32>
    %53 = tpu.concatenate %38, %7, %52 in 1 : vector<64x32xf32>, vector<64x32xf32>, vector<64x32xf32> -> vector<64x96xf32>
    %54 = arith.truncf %53 : vector<64x96xf32> to vector<64x96xbf16>
    %c0_18 = arith.constant 0 : index
    %c0_19 = arith.constant 0 : index
    %55 = vector.load %arg4[%c0_18, %c0_19] : memref<96x32xbf16, #tpu.memory_space<vmem>>, vector<96x32xbf16>
    %cst_20 = arith.constant dense<0.000000e+00> : vector<64x32xf32>
    %56 = tpu.matmul %54, %55, %cst_20 {dimension_numbers = #tpu.dot_dimension_numbers<[1], [0], [0], [1], [0, 0, 1, 1], [], []>} : vector<64x96xbf16>, vector<96x32xbf16>, vector<64x32xf32> -> vector<64x32xf32>
    %c0_21 = arith.constant 0 : index
    %c0_22 = arith.constant 0 : index
    %57 = vector.load %arg5[%c0_21, %c0_22] : memref<1x32xf32, #tpu.memory_space<vmem>>, vector<1x32xf32>
    %58 = vector.broadcast %57 : vector<1x32xf32> to vector<64x32xf32>
    %59 = arith.addf %56, %58 : vector<64x32xf32>
    %cst_23 = arith.constant 0.000000e+00 : f32
    %60 = vector.broadcast %cst_23 : f32 to vector<64x32xf32>
    %61 = arith.maximumf %59, %60 : vector<64x32xf32>
    %62 = vector.shape_cast %61 : vector<64x32xf32> to vector<8x8x32xf32>
    %c0_24 = arith.constant 0 : index
    %c0_25 = arith.constant 0 : index
    %63 = vector.load %arg6[%c0_24, %c0_25] : memref<8x1xf32, #tpu.memory_space<vmem>>, vector<8x1xf32>
    %64 = vector.shape_cast %63 : vector<8x1xf32> to vector<1x8x1xf32>
    %65 = vector.broadcast %64 : vector<1x8x1xf32> to vector<8x8x32xf32>
    %66 = arith.mulf %62, %65 : vector<8x8x32xf32>
    %cst_26 = arith.constant dense<0.000000e+00> : vector<8x32xf32>
    %67 = vector.multi_reduction <add>, %66, %cst_26 [1] : vector<8x8x32xf32> to vector<8x32xf32>
    %c0_27 = arith.constant 0 : index
    %c0_28 = arith.constant 0 : index
    %68 = vector.load %arg7[%c0_27, %c0_28] : memref<1x1xf32, #tpu.memory_space<vmem>>, vector<1x1xf32>
    %69 = vector.broadcast %68 : vector<1x1xf32> to vector<8x32xf32>
    %70 = arith.addf %67, %69 : vector<8x32xf32>
    %71 = math.tanh %70 : vector<8x32xf32>
    %72 = arith.truncf %71 : vector<8x32xf32> to vector<8x32xbf16>
    %c0_29 = arith.constant 0 : index
    %c0_30 = arith.constant 0 : index
    %73 = vector.load %arg8[%c0_29, %c0_30] : memref<32x32xbf16, #tpu.memory_space<vmem>>, vector<32x32xbf16>
    %cst_31 = arith.constant dense<0.000000e+00> : vector<8x32xf32>
    %74 = tpu.matmul %72, %73, %cst_31 {dimension_numbers = #tpu.dot_dimension_numbers<[1], [0], [0], [1], [0, 0, 1, 1], [], []>} : vector<8x32xbf16>, vector<32x32xbf16>, vector<8x32xf32> -> vector<8x32xf32>
    %c0_32 = arith.constant 0 : index
    %c0_33 = arith.constant 0 : index
    %75 = vector.load %arg9[%c0_32, %c0_33] : memref<1x32xf32, #tpu.memory_space<vmem>>, vector<1x32xf32>
    %76 = vector.broadcast %75 : vector<1x32xf32> to vector<8x32xf32>
    %77 = arith.addf %74, %76 : vector<8x32xf32>
    %cst_34 = arith.constant 0.000000e+00 : f32
    %78 = vector.broadcast %cst_34 : f32 to vector<8x32xf32>
    %79 = arith.maximumf %77, %78 : vector<8x32xf32>
    %80 = arith.truncf %79 : vector<8x32xf32> to vector<8x32xbf16>
    %c0_35 = arith.constant 0 : index
    %c0_36 = arith.constant 0 : index
    %81 = vector.load %arg10[%c0_35, %c0_36] : memref<32x32xbf16, #tpu.memory_space<vmem>>, vector<32x32xbf16>
    %cst_37 = arith.constant dense<0.000000e+00> : vector<8x32xf32>
    %82 = tpu.matmul %80, %81, %cst_37 {dimension_numbers = #tpu.dot_dimension_numbers<[1], [0], [0], [1], [0, 0, 1, 1], [], []>} : vector<8x32xbf16>, vector<32x32xbf16>, vector<8x32xf32> -> vector<8x32xf32>
    %c0_38 = arith.constant 0 : index
    %c0_39 = arith.constant 0 : index
    %83 = vector.load %arg11[%c0_38, %c0_39] : memref<1x32xf32, #tpu.memory_space<vmem>>, vector<1x32xf32>
    %84 = vector.broadcast %83 : vector<1x32xf32> to vector<8x32xf32>
    %85 = arith.addf %82, %84 : vector<8x32xf32>
    %c0_40 = arith.constant 0 : index
    %c0_41 = arith.constant 0 : index
    %86 = vector.load %arg12[%c0_40, %c0_41] : memref<8x32xf32, #tpu.memory_space<vmem>>, vector<8x32xf32>
    tpu.vector_store %arg12[%c0_40, %c0_41], %85 {strides = array<i32>} : memref<8x32xf32, #tpu.memory_space<vmem>>, vector<8x32xf32>,
    return
  }
  func.func @transform_0(%arg0: i32) -> (i32, i32) {
    %c0_i32 = arith.constant 0 : i32
    %c0_i32_0 = arith.constant 0 : i32
    return %arg0, %c0_i32 : i32, i32
  }
  func.func @transform_1(%arg0: i32) -> (i32, i32) {
    %c0_i32 = arith.constant 0 : i32
    %c0_i32_0 = arith.constant 0 : i32
    %c0_i32_1 = arith.constant 0 : i32
    return %c0_i32, %c0_i32_0 : i32, i32
  }
  func.func @transform_2(%arg0: i32) -> (i32, i32) {
    %c0_i32 = arith.constant 0 : i32
    %c0_i32_0 = arith.constant 0 : i32
    %c0_i32_1 = arith.constant 0 : i32
    return %c0_i32, %c0_i32_0 : i32, i32
  }
  func.func @transform_3(%arg0: i32) -> (i32, i32) {
    %c0_i32 = arith.constant 0 : i32
    %c0_i32_0 = arith.constant 0 : i32
    %c0_i32_1 = arith.constant 0 : i32
    return %c0_i32, %c0_i32_0 : i32, i32
  }
  func.func @transform_4(%arg0: i32) -> (i32, i32) {
    %c0_i32 = arith.constant 0 : i32
    %c0_i32_0 = arith.constant 0 : i32
    %c0_i32_1 = arith.constant 0 : i32
    return %c0_i32, %c0_i32_0 : i32, i32
  }
  func.func @transform_5(%arg0: i32) -> (i32, i32) {
    %c0_i32 = arith.constant 0 : i32
    %c0_i32_0 = arith.constant 0 : i32
    %c0_i32_1 = arith.constant 0 : i32
    return %c0_i32, %c0_i32_0 : i32, i32
  }
  func.func @transform_6(%arg0: i32) -> (i32, i32) {
    %c0_i32 = arith.constant 0 : i32
    %c0_i32_0 = arith.constant 0 : i32
    %c0_i32_1 = arith.constant 0 : i32
    return %c0_i32, %c0_i32_0 : i32, i32
  }
  func.func @transform_7(%arg0: i32) -> (i32, i32) {
    %c0_i32 = arith.constant 0 : i32
    %c0_i32_0 = arith.constant 0 : i32
    %c0_i32_1 = arith.constant 0 : i32
    return %c0_i32, %c0_i32_0 : i32, i32
  }
  func.func @transform_8(%arg0: i32) -> (i32, i32) {
    %c0_i32 = arith.constant 0 : i32
    %c0_i32_0 = arith.constant 0 : i32
    %c0_i32_1 = arith.constant 0 : i32
    return %c0_i32, %c0_i32_0 : i32, i32
  }
  func.func @transform_9(%arg0: i32) -> (i32, i32) {
    %c0_i32 = arith.constant 0 : i32
    %c0_i32_0 = arith.constant 0 : i32
    %c0_i32_1 = arith.constant 0 : i32
    return %c0_i32, %c0_i32_0 : i32, i32
  }
  func.func @transform_10(%arg0: i32) -> (i32, i32) {
    %c0_i32 = arith.constant 0 : i32
    %c0_i32_0 = arith.constant 0 : i32
    %c0_i32_1 = arith.constant 0 : i32
    return %c0_i32, %c0_i32_0 : i32, i32
  }
  func.func @transform_11(%arg0: i32) -> (i32, i32) {
    %c0_i32 = arith.constant 0 : i32
    %c0_i32_0 = arith.constant 0 : i32
    return %arg0, %c0_i32 : i32, i32
  }
}

</mosaic_0001>

<llo_original>
// kernel: tpu_custom_call.1
$region0: #{tpu_custom_call.1}
  #allocation0 [shape = 'u32[]', space=smem, size = 0x4, offset = 0x4, fixed_abs, tag = 'smem constant byte address 0x4 - core index']
  #allocation1 [shape = 'u32[144,128]{1,0:T(1,128)}', space=vmem, size = 0x12000, scoped, tag = 'internal scratch']
  #allocation2 [shape = 'f32[1,1]{1,0:T(1,128)S(1)}', space=vmem, size = 0x200, scoped, tag = 'scoped memory for tpu_custom_call.1']
  %s0 = inlined_call_operand.vmem [shape: bf16[64,96], index: 0, kind: input, shape index: {}]
  %s1 = inlined_call_operand.vmem [shape: bf16[96,32], index: 1, kind: input, shape index: {}]
  %s2 = inlined_call_operand.vmem [shape: f32[1,32], index: 2, kind: input, shape index: {}]
  %s3 = inlined_call_operand.vmem [shape: bf16[96,32], index: 3, kind: input, shape index: {}]
  %s4 = inlined_call_operand.vmem [shape: f32[1,32], index: 4, kind: input, shape index: {}]
  %s5 = inlined_call_operand.vmem [shape: f32[8,1], index: 5, kind: input, shape index: {}]
  %s6 = inlined_call_operand.<no memory space> [shape: f32[1,1], index: 6, kind: input, shape index: {}]
  %s7 = inlined_call_operand.vmem [shape: bf16[32,32], index: 7, kind: input, shape index: {}]
  %s8 = inlined_call_operand.vmem [shape: f32[1,32], index: 8, kind: input, shape index: {}]
  %s9 = inlined_call_operand.vmem [shape: bf16[32,32], index: 9, kind: input, shape index: {}]
  %s10 = inlined_call_operand.vmem [shape: f32[1,32], index: 10, kind: input, shape index: {}]
  %s11 = inlined_call_operand.hbm [shape: f32[8,32], index: 11, kind: output, shape index: {}]
  %s12 = sld [smem:[#allocation0]]
  $region54: #{tpu_custom_call.1} parent=0
    _
  %s14 = ssub.s32 1, %s12
  %s15 = scalar_select 0, %s14, %s12
  %v16 = vstv %s6
  %17 = vst [vmem:[#allocation2] sm:$0x1] %v16
  $region1: #{tpu_custom_call.1} parent=0
    #allocation3 [shape = 'u8[4096]{0}', space=vmem, size = 0x1000, scoped, tag = 'output window, operand 0, single buffered']
    #allocation4 [shape = 's32[1]{0}', space=sflag, size = 0x4, scoped, tag = 'scoped memory for tpu_custom_call.1']
    %18 = vsyncpa [#allocation4], 0
    // Predicated region
    $region2: #{tpu_custom_call.1} parent=1 // pred_check
      _
    $region3: #{tpu_custom_call.1} parent=1 // pred_check_branch
      %20 = sbr.rel (0) target = $region5
    $region4: #{tpu_custom_call.1} parent=1 // pred_region
      _
    $region5: #{tpu_custom_call.1} parent=1 // pred_fallthru
      _
    // Predicated region
    $region6: #{tpu_custom_call.1} parent=1 // pred_check
      _
    $region7: #{tpu_custom_call.1} parent=1 // pred_check_branch
      %22 = sbr.rel (0) target = $region9
    $region8: #{tpu_custom_call.1} parent=1 // pred_region
      _
    $region9: #{tpu_custom_call.1} parent=1 // pred_fallthru
      _
    // Predicated region
    $region10: #{tpu_custom_call.1} parent=1 // pred_check
      _
    $region11: #{tpu_custom_call.1} parent=1 // pred_check_branch
      %24 = sbr.rel (0) target = $region13
    $region12: #{tpu_custom_call.1} parent=1 // pred_region
      _
    $region13: #{tpu_custom_call.1} parent=1 // pred_fallthru
      _
    // Predicated region
    $region14: #{tpu_custom_call.1} parent=1 // pred_check
      _
    $region15: #{tpu_custom_call.1} parent=1 // pred_check_branch
      %26 = sbr.rel (0) target = $region17
    $region16: #{tpu_custom_call.1} parent=1 // pred_region
      _
    $region17: #{tpu_custom_call.1} parent=1 // pred_fallthru
      _
    // Predicated region
    $region18: #{tpu_custom_call.1} parent=1 // pred_check
      _
    $region19: #{tpu_custom_call.1} parent=1 // pred_check_branch
      %28 = sbr.rel (0) target = $region21
    $region20: #{tpu_custom_call.1} parent=1 // pred_region
      _
    $region21: #{tpu_custom_call.1} parent=1 // pred_fallthru
      _
    // Predicated region
    $region22: #{tpu_custom_call.1} parent=1 // pred_check
      _
    $region23: #{tpu_custom_call.1} parent=1 // pred_check_branch
      %30 = sbr.rel (0) target = $region25
    $region24: #{tpu_custom_call.1} parent=1 // pred_region
      _
    $region25: #{tpu_custom_call.1} parent=1 // pred_fallthru
      _
    // Predicated region
    $region26: #{tpu_custom_call.1} parent=1 // pred_check
      _
    $region27: #{tpu_custom_call.1} parent=1 // pred_check_branch
      %32 = sbr.rel (0) target = $region29
    $region28: #{tpu_custom_call.1} parent=1 // pred_region
      _
    $region29: #{tpu_custom_call.1} parent=1 // pred_fallthru
      _
    // Predicated region
    $region30: #{tpu_custom_call.1} parent=1 // pred_check
      _
    $region31: #{tpu_custom_call.1} parent=1 // pred_check_branch
      %34 = sbr.rel (0) target = $region33
    $region32: #{tpu_custom_call.1} parent=1 // pred_region
      _
    $region33: #{tpu_custom_call.1} parent=1 // pred_fallthru
      _
    // Predicated region
    $region34: #{tpu_custom_call.1} parent=1 // pred_check
      _
    $region35: #{tpu_custom_call.1} parent=1 // pred_check_branch
      %36 = sbr.rel (0) target = $region37
    $region36: #{tpu_custom_call.1} parent=1 // pred_region
      _
    $region37: #{tpu_custom_call.1} parent=1 // pred_fallthru
      _
    // Predicated region
    $region38: #{tpu_custom_call.1} parent=1 // pred_check
      _
    $region39: #{tpu_custom_call.1} parent=1 // pred_check_branch
      %38 = sbr.rel (0) target = $region41
    $region40: #{tpu_custom_call.1} parent=1 // pred_region
      _
    $region41: #{tpu_custom_call.1} parent=1 // pred_fallthru
      _
    // Predicated region
    $region42: #{tpu_custom_call.1} parent=1 // pred_check
      _
    $region43: #{tpu_custom_call.1} parent=1 // pred_check_branch
      %40 = sbr.rel (0) target = $region45
    $region44: #{tpu_custom_call.1} parent=1 // pred_region
      _
    $region45: #{tpu_custom_call.1} parent=1 // pred_fallthru
      _
    %v42 = vld [vmem:[%s0] sm:$0xf]
    %v43 = vld [vmem:[%s0 + $0x4] sm:$0xf]
    %v44 = vld [vmem:[%s0 + $0x8] sm:$0xf]
    %v45 = vld [vmem:[%s0 + $0xc] sm:$0xf]
    %v46 = vld [vmem:[%s0 + $0x10] sm:$0xf]
    %v47 = vld [vmem:[%s0 + $0x14] sm:$0xf]
    %v48 = vld [vmem:[%s0 + $0x18] sm:$0xf]
    %v49 = vld [vmem:[%s0 + $0x1c] sm:$0xf]
    %v50 = vld [vmem:[%s1] sm:$0xf]
    %v51 = vld [vmem:[%s1 + $0x4] sm:$0xf]
    %v52 = vld [vmem:[%s1 + $0x8] sm:$0xf]
    %v53 = vld [vmem:[%s1 + $0xc] sm:$0xf]
    %v54 = vld [vmem:[%s1 + $0x10] sm:$0xf]
    %v55 = vld [vmem:[%s1 + $0x14] sm:$0xf]
    %v56 = vld [vmem:[%s1 + $0x18] sm:$0xf]
    %v57 = vld [vmem:[%s1 + $0x1c] sm:$0xf]
    %v58 = vld [vmem:[%s1 + $0x20] sm:$0xf]
    %v59 = vld [vmem:[%s1 + $0x24] sm:$0xf]
    %v60 = vld [vmem:[%s1 + $0x28] sm:$0xf]
    %v61 = vld [vmem:[%s1 + $0x2c] sm:$0xf]
    %v62 = vld [vmem:[%s2] sm:$0x1]
    %v64 = vlaneseq
    %v65 = vshrl.u32 %v64, 7
    %v66 = vsub.s32 0, %v65
    %v67 = vrot.slane %v62, %v66
    %v77 = vunpack.c.l.b16 %v42
    %v78 = vunpack.c.l.b16 %v43
    %v79 = vunpack.c.l.b16 %v44
    %v80 = vunpack.c.l.b16 %v45
    %v81 = vunpack.c.l.b16 %v46
    %v82 = vunpack.c.l.b16 %v47
    %v83 = vunpack.c.l.b16 %v48
    %v84 = vunpack.c.l.b16 %v49
    %v85 = vpack.c.b16 %v78, %v77
    %v86 = vpack.c.b16 %v80, %v79
    %v87 = vpack.c.b16 %v82, %v81
    %v88 = vpack.c.b16 %v84, %v83
    %v101 = vunpack.c.l.b16 %v50
    %v102 = vunpack.c.l.b16 %v51
    %v103 = vunpack.c.l.b16 %v52
    %v104 = vunpack.c.l.b16 %v53
    %v105 = vunpack.c.l.b16 %v54
    %v106 = vunpack.c.l.b16 %v55
    %v107 = vunpack.c.l.b16 %v56
    %v108 = vunpack.c.l.b16 %v57
    %v109 = vunpack.c.l.b16 %v58
    %v110 = vunpack.c.l.b16 %v59
    %v111 = vunpack.c.l.b16 %v60
    %v112 = vunpack.c.l.b16 %v61
    %v113 = vpack.c.b16 %v102, %v101
    %v114 = vpack.c.b16 %v104, %v103
    %v115 = vpack.c.b16 %v106, %v105
    %v116 = vpack.c.b16 %v108, %v107
    %v117 = vpack.c.b16 %v110, %v109
    %v118 = vpack.c.b16 %v112, %v111
    %vm125 = vcmask 785408
    %v127 = vsel %vm125, %v85, 0
    %v130 = vsel %vm125, %v86, 0
    %v133 = vsel %vm125, %v87, 0
    %v136 = vsel %vm125, %v88, 0
    %138 = vmatprep.subr.bf16.mxu0 0
    %139 = vmatpush1.bf16.msra.mxu0 %v113
    %140 = vmatprep.subr.bf16.mxu0 0
    %141 = vmatpush1.bf16.msra.mxu0 %v114
    %142 = vmatprep.subr.bf16.mxu0 0
    %143 = vmatpush1.bf16.msra.mxu0 %v115
    %144 = vmatprep.subr.bf16.mxu0 0
    %145 = vmatpush1.bf16.msra.mxu0 %v116
    %146 = vmatprep.subr.bf16.mxu0 0
    %147 = vmatpush1.bf16.msra.mxu0 %v117
    %148 = vmatprep.subr.bf16.mxu0 0
    %149 = vmatpush1.bf16.msra.mxu0 %v118
    %150 = vmatprep.subr.bf16.mxu0 0
    %151 = vmatpush1.bf16.msra.mxu0 0
    %152 = vmatprep.subr.bf16.mxu0 0
    %153 = vmatpush1.bf16.msra.mxu0 0
    %154 = vmatprep.subr.bf16.mxu0 0
    %155 = vmatpush1.bf16.msra.mxu0 0
    %156 = vmatprep.subr.bf16.mxu0 0
    %157 = vmatpush1.bf16.msra.mxu0 0
    %158 = vmatprep.subr.bf16.mxu0 0
    %159 = vmatpush1.bf16.msra.mxu0 0
    %160 = vmatprep.subr.bf16.mxu0 0
    %161 = vmatpush1.bf16.msra.mxu0 0
    %162 = vmatprep.subr.bf16.mxu0 0
    %163 = vmatpush1.bf16.msra.mxu0 0
    %164 = vmatprep.subr.bf16.mxu0 0
    %165 = vmatpush1.bf16.msra.mxu0 0
    %166 = vmatprep.subr.bf16.mxu0 0
    %167 = vmatpush1.bf16.msra.mxu0 0
    %168 = vmatprep.subr.bf16.mxu0 0
    %169 = vmatpush1.bf16.msra.mxu0 0
    %170 = vmatprep.mubr.bf16.mxu0 0
    %171 = vmatmul.mubr.bf16.gmra.mrb[0].mxu0 %v127
    %v172 = vpop.f32.mrb[0].mxu0
    %v173 = vadd.f32 %v67, %v172
    %v174 = vpop.f32.mrb[0].mxu0
    %v175 = vpop.f32.mrb[0].mxu0
    %v176 = vadd.f32 %v67, %v175
    %v177 = vpop.f32.mrb[0].mxu0
    %178 = vmatprep.mubr.bf16.mxu0 0
    %179 = vmatmul.mubr.bf16.gmra.mrb[0].mxu0 %v130
    %v180 = vpop.f32.mrb[0].mxu0
    %v181 = vadd.f32 %v67, %v180
    %v182 = vpop.f32.mrb[0].mxu0
    %v183 = vpop.f32.mrb[0].mxu0
    %v184 = vadd.f32 %v67, %v183
    %v185 = vpop.f32.mrb[0].mxu0
    %186 = vmatprep.mubr.bf16.mxu0 0
    %187 = vmatmul.mubr.bf16.gmra.mrb[0].mxu0 %v133
    %v188 = vpop.f32.mrb[0].mxu0
    %v189 = vadd.f32 %v67, %v188
    %v190 = vpop.f32.mrb[0].mxu0
    %v191 = vpop.f32.mrb[0].mxu0
    %v192 = vadd.f32 %v67, %v191
    %v193 = vpop.f32.mrb[0].mxu0
    %194 = vmatprep.mubr.bf16.mxu0 0
    %195 = vmatmul.mubr.bf16.gmra.mrb[0].mxu0 %v136
    %v196 = vpop.f32.mrb[0].mxu0
    %v197 = vadd.f32 %v67, %v196
    %v198 = vpop.f32.mrb[0].mxu0
    %v199 = vpop.f32.mrb[0].mxu0
    %v200 = vadd.f32 %v67, %v199
    %v201 = vpop.f32.mrb[0].mxu0
    %202 = vdwg.mxu0
    %v203 = vmax.f32 %v173, 0.0
    %v204 = vmax.f32 %v176, 0.0
    %v205 = vmax.f32 %v181, 0.0
    %v206 = vmax.f32 %v184, 0.0
    %v207 = vmax.f32 %v189, 0.0
    %v208 = vmax.f32 %v192, 0.0
    %v209 = vmax.f32 %v197, 0.0
    %v210 = vmax.f32 %v200, 0.0
    %v211 = vlaneseq
    %v212 = vshrl.u32 %v211, 7
    %v213 = vadd.s32 %v212, 8
    %v214 = vadd.s32 %v212, 16
    %v215 = vadd.s32 %v212, 24
    %v216 = vadd.s32 %v212, 32
    %v217 = vadd.s32 %v212, 40
    %v218 = vadd.s32 %v212, 48
    %v219 = vadd.s32 %v212, 56
    %vm220 = vcmp.lt.s32.totalorder %v212, 0
    %v221 = vsub.s32 0, %v212
    %v222 = vsel %vm220, %v221, %v212
    %v223 = vshrl.u32 %v222, 3
    %v224 = vand.u32 %v222, 7
    %v225 = vsub.s32 0, %v224
    %v226 = vsel %vm220, %v225, %v224
    %vm227 = vcmp.lt.s32.totalorder %v213, 0
    %v228 = vsub.s32 0, %v213
    %v229 = vsel %vm227, %v228, %v213
    %v230 = vshrl.u32 %v229, 3
    %v231 = vand.u32 %v229, 7
    %v232 = vsub.s32 0, %v231
    %v233 = vsel %vm227, %v232, %v231
    %vm234 = vcmp.lt.s32.totalorder %v214, 0
    %v235 = vsub.s32 0, %v214
    %v236 = vsel %vm234, %v235, %v214
    %v237 = vshrl.u32 %v236, 3
    %v238 = vand.u32 %v236, 7
    %v239 = vsub.s32 0, %v238
    %v240 = vsel %vm234, %v239, %v238
    %vm241 = vcmp.lt.s32.totalorder %v215, 0
    %v242 = vsub.s32 0, %v215
    %v243 = vsel %vm241, %v242, %v215
    %v244 = vshrl.u32 %v243, 3
    %v245 = vand.u32 %v243, 7
    %v246 = vsub.s32 0, %v245
    %v247 = vsel %vm241, %v246, %v245
    %vm248 = vcmp.lt.s32.totalorder %v216, 0
    %v249 = vsub.s32 0, %v216
    %v250 = vsel %vm248, %v249, %v216
    %v251 = vshrl.u32 %v250, 3
    %v252 = vand.u32 %v250, 7
    %v253 = vsub.s32 0, %v252
    %v254 = vsel %vm248, %v253, %v252
    %vm255 = vcmp.lt.s32.totalorder %v217, 0
    %v256 = vsub.s32 0, %v217
    %v257 = vsel %vm255, %v256, %v217
    %v258 = vshrl.u32 %v257, 3
    %v259 = vand.u32 %v257, 7
    %v260 = vsub.s32 0, %v259
    %v261 = vsel %vm255, %v260, %v259
    %vm262 = vcmp.lt.s32.totalorder %v218, 0
    %v263 = vsub.s32 0, %v218
    %v264 = vsel %vm262, %v263, %v218
    %v265 = vshrl.u32 %v264, 3
    %v266 = vand.u32 %v264, 7
    %v267 = vsub.s32 0, %v266
    %v268 = vsel %vm262, %v267, %v266
    %vm269 = vcmp.lt.s32.totalorder %v219, 0
    %v270 = vsub.s32 0, %v219
    %v271 = vsel %vm269, %v270, %v219
    %v272 = vshrl.u32 %v271, 3
    %v273 = vand.u32 %v271, 7
    %v274 = vsub.s32 0, %v273
    %v275 = vsel %vm269, %v274, %v273
    %vm276 = vcmp.ne.s32.totalorder %v226, 0
    %vm277 = vcmp.ne.s32.totalorder %v233, 0
    %vm278 = vcmp.ne.s32.totalorder %v240, 0
    %vm279 = vcmp.ne.s32.totalorder %v247, 0
    %vm280 = vcmp.ne.s32.totalorder %v254, 0
    %vm281 = vcmp.ne.s32.totalorder %v261, 0
    %vm282 = vcmp.ne.s32.totalorder %v268, 0
    %vm283 = vcmp.ne.s32.totalorder %v275, 0
    %vm284 = vcmp.lt.s32.totalorder %v226, 0
    %vm285 = vcmp.lt.s32.totalorder %v233, 0
    %vm286 = vcmp.lt.s32.totalorder %v240, 0
    %vm287 = vcmp.lt.s32.totalorder %v247, 0
    %vm288 = vcmp.lt.s32.totalorder %v254, 0
    %vm289 = vcmp.lt.s32.totalorder %v261, 0
    %vm290 = vcmp.lt.s32.totalorder %v268, 0
    %vm291 = vcmp.lt.s32.totalorder %v275, 0
    %vm292 = vmand %vm284, %vm276
    %vm293 = vmand %vm285, %vm277
    %vm294 = vmand %vm286, %vm278
    %vm295 = vmand %vm287, %vm279
    %vm296 = vmand %vm288, %vm280
    %vm297 = vmand %vm289, %vm281
    %vm298 = vmand %vm290, %vm282
    %vm299 = vmand %vm291, %vm283
    %v300 = vadd.s32 %v226, 8
    %v301 = vadd.s32 %v233, 8
    %v302 = vadd.s32 %v240, 8
    %v303 = vadd.s32 %v247, 8
    %v304 = vadd.s32 %v254, 8
    %v305 = vadd.s32 %v261, 8
    %v306 = vadd.s32 %v268, 8
    %v307 = vadd.s32 %v275, 8
    %v308 = vsel %vm292, %v300, %v226
    %v309 = vsel %vm293, %v301, %v233
    %v310 = vsel %vm294, %v302, %v240
    %v311 = vsel %vm295, %v303, %v247
    %v312 = vsel %vm296, %v304, %v254
    %v313 = vsel %vm297, %v305, %v261
    %v314 = vsel %vm298, %v306, %v268
    %v315 = vsel %vm299, %v307, %v275
    %v317 = vrot.slane %v210, 7
    %vm326 = vcmask 1040384
    %v327 = vrot.slane %v203, 7
    %v328 = vrot.slane %v204, 7
    %v329 = vsel %vm326, %v327, %v328
    %v330 = vrot.slane %v205, 7
    %v331 = vsel %vm326, %v328, %v330
    %v332 = vrot.slane %v206, 7
    %v333 = vsel %vm326, %v330, %v332
    %v334 = vrot.slane %v207, 7
    %v335 = vsel %vm326, %v332, %v334
    %v336 = vrot.slane %v208, 7
    %v337 = vsel %vm326, %v334, %v336
    %v338 = vrot.slane %v209, 7
    %v339 = vsel %vm326, %v336, %v338
    %v340 = vsel %vm326, %v338, %v317
    %v349 = vsel %vm326, %v317, %v327
    %v350 = vadd.s32 %v308, 4294967295
    %v351 = vadd.s32 %v309, 4294967295
    %v352 = vadd.s32 %v310, 4294967295
    %v353 = vadd.s32 %v311, 4294967295
    %v354 = vadd.s32 %v312, 4294967295
    %v355 = vadd.s32 %v313, 4294967295
    %v356 = vadd.s32 %v314, 4294967295
    %v357 = vadd.s32 %v315, 4294967295
    %vm358 = vcmp.ge.s32.totalorder %v350, 0
    %vm359 = vcmp.ge.s32.totalorder %v351, 0
    %vm360 = vcmp.ge.s32.totalorder %v352, 0
    %vm361 = vcmp.ge.s32.totalorder %v353, 0
    %vm362 = vcmp.ge.s32.totalorder %v354, 0
    %vm363 = vcmp.ge.s32.totalorder %v355, 0
    %vm364 = vcmp.ge.s32.totalorder %v356, 0
    %vm365 = vcmp.ge.s32.totalorder %v357, 0
    %vm366 = vcmp.lt.s32.totalorder %v350, 8
    %vm367 = vcmp.lt.s32.totalorder %v351, 8
    %vm368 = vcmp.lt.s32.totalorder %v352, 8
    %vm369 = vcmp.lt.s32.totalorder %v353, 8
    %vm370 = vcmp.lt.s32.totalorder %v354, 8
    %vm371 = vcmp.lt.s32.totalorder %v355, 8
    %vm372 = vcmp.lt.s32.totalorder %v356, 8
    %vm373 = vcmp.lt.s32.totalorder %v357, 8
    %vm374 = vmand %vm358, %vm366
    %vm375 = vmand %vm359, %vm367
    %vm376 = vmand %vm360, %vm368
    %vm377 = vmand %vm361, %vm369
    %vm378 = vmand %vm362, %vm370
    %vm379 = vmand %vm363, %vm371
    %vm380 = vmand %vm364, %vm372
    %vm381 = vmand %vm365, %vm373
    %v382 = vsel %vm374, %v349, 0.0
    %v383 = vsel %vm375, %v329, 0.0
    %v384 = vsel %vm376, %v331, 0.0
    %v385 = vsel %vm377, %v333, 0.0
    %v386 = vsel %vm378, %v335, 0.0
    %v387 = vsel %vm379, %v337, 0.0
    %v388 = vsel %vm380, %v339, 0.0
    %v389 = vsel %vm381, %v340, 0.0
    %vm390 = vcmask 1046528
    %v391 = vrot.slane %v203, 1
    %v392 = vrot.slane %v204, 1
    %v393 = vsel %vm390, %v391, %v392
    %v394 = vrot.slane %v205, 1
    %v395 = vsel %vm390, %v392, %v394
    %v396 = vrot.slane %v206, 1
    %v397 = vsel %vm390, %v394, %v396
    %v398 = vrot.slane %v207, 1
    %v399 = vsel %vm390, %v396, %v398
    %v400 = vrot.slane %v208, 1
    %v401 = vsel %vm390, %v398, %v400
    %v402 = vrot.slane %v209, 1
    %v403 = vsel %vm390, %v400, %v402
    %v404 = vrot.slane %v210, 1
    %v405 = vsel %vm390, %v402, %v404
    %v415 = vsel %vm390, %v404, %v391
    %v416 = vadd.s32 %v308, 1
    %v417 = vadd.s32 %v309, 1
    %v418 = vadd.s32 %v310, 1
    %v419 = vadd.s32 %v311, 1
    %v420 = vadd.s32 %v312, 1
    %v421 = vadd.s32 %v313, 1
    %v422 = vadd.s32 %v314, 1
    %v423 = vadd.s32 %v315, 1
    %vm424 = vcmp.ge.s32.totalorder %v416, 0
    %vm425 = vcmp.ge.s32.totalorder %v417, 0
    %vm426 = vcmp.ge.s32.totalorder %v418, 0
    %vm427 = vcmp.ge.s32.totalorder %v419, 0
    %vm428 = vcmp.ge.s32.totalorder %v420, 0
    %vm429 = vcmp.ge.s32.totalorder %v421, 0
    %vm430 = vcmp.ge.s32.totalorder %v422, 0
    %vm431 = vcmp.ge.s32.totalorder %v423, 0
    %vm432 = vcmp.lt.s32.totalorder %v416, 8
    %vm433 = vcmp.lt.s32.totalorder %v417, 8
    %vm434 = vcmp.lt.s32.totalorder %v418, 8
    %vm435 = vcmp.lt.s32.totalorder %v419, 8
    %vm436 = vcmp.lt.s32.totalorder %v420, 8
    %vm437 = vcmp.lt.s32.totalorder %v421, 8
    %vm438 = vcmp.lt.s32.totalorder %v422, 8
    %vm439 = vcmp.lt.s32.totalorder %v423, 8
    %vm440 = vmand %vm424, %vm432
    %vm441 = vmand %vm425, %vm433
    %vm442 = vmand %vm426, %vm434
    %vm443 = vmand %vm427, %vm435
    %vm444 = vmand %vm428, %vm436
    %vm445 = vmand %vm429, %vm437
    %vm446 = vmand %vm430, %vm438
    %vm447 = vmand %vm431, %vm439
    %v448 = vsel %vm440, %v393, 0.0
    %v449 = vsel %vm441, %v395, 0.0
    %v450 = vsel %vm442, %v397, 0.0
    %v451 = vsel %vm443, %v399, 0.0
    %v452 = vsel %vm444, %v401, 0.0
    %v453 = vsel %vm445, %v403, 0.0
    %v454 = vsel %vm446, %v405, 0.0
    %v455 = vsel %vm447, %v415, 0.0
    %456 = vrot.lane.b32.xlu0 %v203, 32
    %v457 = vpop.permute.xlu0 %456
    %458 = vrot.lane.b32.xlu0 %v204, 32
    %v459 = vpop.permute.xlu0 %458
    %460 = vrot.lane.b32.xlu0 %v205, 32
    %v461 = vpop.permute.xlu0 %460
    %462 = vrot.lane.b32.xlu0 %v206, 32
    %v463 = vpop.permute.xlu0 %462
    %464 = vrot.lane.b32.xlu0 %v207, 32
    %v465 = vpop.permute.xlu0 %464
    %466 = vrot.lane.b32.xlu0 %v208, 32
    %v467 = vpop.permute.xlu0 %466
    %468 = vrot.lane.b32.xlu0 %v209, 32
    %v469 = vpop.permute.xlu0 %468
    %470 = vrot.lane.b32.xlu0 %v210, 32
    %v471 = vpop.permute.xlu0 %470
    %488 = vrot.lane.b32.xlu0 %v448, 64
    %v489 = vpop.permute.xlu0 %488
    %490 = vrot.lane.b32.xlu0 %v449, 64
    %v491 = vpop.permute.xlu0 %490
    %492 = vrot.lane.b32.xlu0 %v450, 64
    %v493 = vpop.permute.xlu0 %492
    %494 = vrot.lane.b32.xlu0 %v451, 64
    %v495 = vpop.permute.xlu0 %494
    %496 = vrot.lane.b32.xlu0 %v452, 64
    %v497 = vpop.permute.xlu0 %496
    %498 = vrot.lane.b32.xlu0 %v453, 64
    %v499 = vpop.permute.xlu0 %498
    %500 = vrot.lane.b32.xlu0 %v454, 64
    %v501 = vpop.permute.xlu0 %500
    %502 = vrot.lane.b32.xlu0 %v455, 64
    %v503 = vpop.permute.xlu0 %502
    %vm512 = vcmask 261120
    %v513 = vsel %vm512, %v382, %v457
    %v514 = vsel %vm512, %v383, %v459
    %v515 = vsel %vm512, %v384, %v461
    %v516 = vsel %vm512, %v385, %v463
    %v517 = vsel %vm512, %v386, %v465
    %v518 = vsel %vm512, %v387, %v467
    %v519 = vsel %vm512, %v388, %v469
    %v520 = vsel %vm512, %v389, %v471
    %vm521 = vcmask 523264
    %v522 = vsel %vm521, %v513, %v489
    %v523 = vsel %vm521, %v514, %v491
    %v524 = vsel %vm521, %v515, %v493
    %v525 = vsel %vm521, %v516, %v495
    %v526 = vsel %vm521, %v517, %v497
    %v527 = vsel %vm521, %v518, %v499
    %v528 = vsel %vm521, %v519, %v501
    %v529 = vsel %vm521, %v520, %v503
    %v530 = vpack.c.bf16 %v523, %v522
    %v531 = vpack.c.bf16 %v525, %v524
    %v532 = vpack.c.bf16 %v527, %v526
    %v533 = vpack.c.bf16 %v529, %v528
    %v534 = vld [vmem:[%s3] sm:$0xf]
    %v535 = vld [vmem:[%s3 + $0x4] sm:$0xf]
    %v536 = vld [vmem:[%s3 + $0x8] sm:$0xf]
    %v537 = vld [vmem:[%s3 + $0xc] sm:$0xf]
    %v538 = vld [vmem:[%s3 + $0x10] sm:$0xf]
    %v539 = vld [vmem:[%s3 + $0x14] sm:$0xf]
    %v540 = vld [vmem:[%s3 + $0x18] sm:$0xf]
    %v541 = vld [vmem:[%s3 + $0x1c] sm:$0xf]
    %v542 = vld [vmem:[%s3 + $0x20] sm:$0xf]
    %v543 = vld [vmem:[%s3 + $0x24] sm:$0xf]
    %v544 = vld [vmem:[%s3 + $0x28] sm:$0xf]
    %v545 = vld [vmem:[%s3 + $0x2c] sm:$0xf]
    %v546 = vld [vmem:[%s4] sm:$0x1]
    %v548 = vlaneseq
    %v549 = vshrl.u32 %v548, 7
    %v550 = vsub.s32 0, %v549
    %v551 = vrot.slane %v546, %v550
    %v565 = vunpack.c.l.b16 %v534
    %v566 = vunpack.c.l.b16 %v535
    %v567 = vunpack.c.l.b16 %v536
    %v568 = vunpack.c.l.b16 %v537
    %v569 = vunpack.c.l.b16 %v538
    %v570 = vunpack.c.l.b16 %v539
    %v571 = vunpack.c.l.b16 %v540
    %v572 = vunpack.c.l.b16 %v541
    %v573 = vunpack.c.l.b16 %v542
    %v574 = vunpack.c.l.b16 %v543
    %v575 = vunpack.c.l.b16 %v544
    %v576 = vunpack.c.l.b16 %v545
    %v577 = vpack.c.b16 %v566, %v565
    %v578 = vpack.c.b16 %v568, %v567
    %v579 = vpack.c.b16 %v570, %v569
    %v580 = vpack.c.b16 %v572, %v571
    %v581 = vpack.c.b16 %v574, %v573
    %v582 = vpack.c.b16 %v576, %v575
    %v590 = vsel %vm125, %v530, 0
    %v593 = vsel %vm125, %v531, 0
    %v596 = vsel %vm125, %v532, 0
    %v599 = vsel %vm125, %v533, 0
    %601 = vmatprep.subr.bf16.mxu0 0
    %602 = vmatpush1.bf16.msra.mxu0 %v577
    %603 = vmatprep.subr.bf16.mxu0 0
    %604 = vmatpush1.bf16.msra.mxu0 %v578
    %605 = vmatprep.subr.bf16.mxu0 0
    %606 = vmatpush1.bf16.msra.mxu0 %v579
    %607 = vmatprep.subr.bf16.mxu0 0
    %608 = vmatpush1.bf16.msra.mxu0 %v580
    %609 = vmatprep.subr.bf16.mxu0 0
    %610 = vmatpush1.bf16.msra.mxu0 %v581
    %611 = vmatprep.subr.bf16.mxu0 0
    %612 = vmatpush1.bf16.msra.mxu0 %v582
    %613 = vmatprep.subr.bf16.mxu0 0
    %614 = vmatpush1.bf16.msra.mxu0 0
    %615 = vmatprep.subr.bf16.mxu0 0
    %616 = vmatpush1.bf16.msra.mxu0 0
    %617 = vmatprep.subr.bf16.mxu0 0
    %618 = vmatpush1.bf16.msra.mxu0 0
    %619 = vmatprep.subr.bf16.mxu0 0
    %620 = vmatpush1.bf16.msra.mxu0 0
    %621 = vmatprep.subr.bf16.mxu0 0
    %622 = vmatpush1.bf16.msra.mxu0 0
    %623 = vmatprep.subr.bf16.mxu0 0
    %624 = vmatpush1.bf16.msra.mxu0 0
    %625 = vmatprep.subr.bf16.mxu0 0
    %626 = vmatpush1.bf16.msra.mxu0 0
    %627 = vmatprep.subr.bf16.mxu0 0
    %628 = vmatpush1.bf16.msra.mxu0 0
    %629 = vmatprep.subr.bf16.mxu0 0
    %630 = vmatpush1.bf16.msra.mxu0 0
    %631 = vmatprep.subr.bf16.mxu0 0
    %632 = vmatpush1.bf16.msra.mxu0 0
    %633 = vmatprep.mubr.bf16.mxu0 0
    %634 = vmatmul.mubr.bf16.gmra.mrb[0].mxu0 %v590
    %v635 = vpop.f32.mrb[0].mxu0
    %v636 = vadd.f32 %v551, %v635
    %v637 = vpop.f32.mrb[0].mxu0
    %v638 = vpop.f32.mrb[0].mxu0
    %v639 = vadd.f32 %v551, %v638
    %v640 = vpop.f32.mrb[0].mxu0
    %641 = vmatprep.mubr.bf16.mxu0 0
    %642 = vmatmul.mubr.bf16.gmra.mrb[0].mxu0 %v593
    %v643 = vpop.f32.mrb[0].mxu0
    %v644 = vadd.f32 %v551, %v643
    %v645 = vpop.f32.mrb[0].mxu0
    %v646 = vpop.f32.mrb[0].mxu0
    %v647 = vadd.f32 %v551, %v646
    %v648 = vpop.f32.mrb[0].mxu0
    %649 = vmatprep.mubr.bf16.mxu0 0
    %650 = vmatmul.mubr.bf16.gmra.mrb[0].mxu0 %v596
    %v651 = vpop.f32.mrb[0].mxu0
    %v652 = vadd.f32 %v551, %v651
    %v653 = vpop.f32.mrb[0].mxu0
    %v654 = vpop.f32.mrb[0].mxu0
    %v655 = vadd.f32 %v551, %v654
    %v656 = vpop.f32.mrb[0].mxu0
    %657 = vmatprep.mubr.bf16.mxu0 0
    %658 = vmatmul.mubr.bf16.gmra.mrb[0].mxu0 %v599
    %v659 = vpop.f32.mrb[0].mxu0
    %v660 = vadd.f32 %v551, %v659
    %v661 = vpop.f32.mrb[0].mxu0
    %v662 = vpop.f32.mrb[0].mxu0
    %v663 = vadd.f32 %v551, %v662
    %v664 = vpop.f32.mrb[0].mxu0
    %665 = vdwg.mxu0
    %v666 = vmax.f32 %v636, 0.0
    %v667 = vmax.f32 %v639, 0.0
    %v668 = vmax.f32 %v644, 0.0
    %v669 = vmax.f32 %v647, 0.0
    %v670 = vmax.f32 %v652, 0.0
    %v671 = vmax.f32 %v655, 0.0
    %v672 = vmax.f32 %v660, 0.0
    %v673 = vmax.f32 %v663, 0.0
    %v674 = vld [vmem:[%s5] sm:$0xff]
    %676 = vset.pattern.permute.xlu0 0
    %677 = vperm.xlu0 %676, %v674
    %v678 = vpop.permute.xlu0 %677
    %v680 = vmul.f32 %v666, %v678
    %v681 = vmul.f32 %v667, %v678
    %v682 = vmul.f32 %v668, %v678
    %v683 = vmul.f32 %v669, %v678
    %v684 = vmul.f32 %v670, %v678
    %v685 = vmul.f32 %v671, %v678
    %v686 = vmul.f32 %v672, %v678
    %v687 = vmul.f32 %v673, %v678
    %v688 = vsel %vm512, %v680, 0.0
    %v689 = vrot.slane %v688, 4
    %v690 = vadd.f32 %v688, %v689
    %v691 = vrot.slane %v690, 2
    %v692 = vadd.f32 %v690, %v691
    %v693 = vrot.slane %v692, 1
    %v694 = vadd.f32 %v692, %v693
    %v695 = vsel %vm512, %v681, 0.0
    %v696 = vrot.slane %v695, 4
    %v697 = vadd.f32 %v695, %v696
    %v698 = vrot.slane %v697, 2
    %v699 = vadd.f32 %v697, %v698
    %v700 = vrot.slane %v699, 1
    %v701 = vadd.f32 %v699, %v700
    %v702 = vsel %vm512, %v682, 0.0
    %v703 = vrot.slane %v702, 4
    %v704 = vadd.f32 %v702, %v703
    %v705 = vrot.slane %v704, 2
    %v706 = vadd.f32 %v704, %v705
    %v707 = vrot.slane %v706, 1
    %v708 = vadd.f32 %v706, %v707
    %v709 = vsel %vm512, %v683, 0.0
    %v710 = vrot.slane %v709, 4
    %v711 = vadd.f32 %v709, %v710
    %v712 = vrot.slane %v711, 2
    %v713 = vadd.f32 %v711, %v712
    %v714 = vrot.slane %v713, 1
    %v715 = vadd.f32 %v713, %v714
    %v716 = vsel %vm512, %v684, 0.0
    %v717 = vrot.slane %v716, 4
    %v718 = vadd.f32 %v716, %v717
    %v719 = vrot.slane %v718, 2
    %v720 = vadd.f32 %v718, %v719
    %v721 = vrot.slane %v720, 1
    %v722 = vadd.f32 %v720, %v721
    %v723 = vsel %vm512, %v685, 0.0
    %v724 = vrot.slane %v723, 4
    %v725 = vadd.f32 %v723, %v724
    %v726 = vrot.slane %v725, 2
    %v727 = vadd.f32 %v725, %v726
    %v728 = vrot.slane %v727, 1
    %v729 = vadd.f32 %v727, %v728
    %v730 = vsel %vm512, %v686, 0.0
    %v731 = vrot.slane %v730, 4
    %v732 = vadd.f32 %v730, %v731
    %v733 = vrot.slane %v732, 2
    %v734 = vadd.f32 %v732, %v733
    %v735 = vrot.slane %v734, 1
    %v736 = vadd.f32 %v734, %v735
    %v737 = vsel %vm512, %v687, 0.0
    %v738 = vrot.slane %v737, 4
    %v739 = vadd.f32 %v737, %v738
    %v740 = vrot.slane %v739, 2
    %v741 = vadd.f32 %v739, %v740
    %v742 = vrot.slane %v741, 1
    %v743 = vadd.f32 %v741, %v742
    %v744 = vld [vmem:[#allocation2] sm:$0x1]
    %v746 = vlaneseq
    %v747 = vshrl.u32 %v746, 7
    %v748 = vsub.s32 0, %v747
    %v749 = vrot.slane %v744, %v748
    %750 = vset.pattern.permute.xlu0 0
    %751 = vperm.xlu0 %750, %v749
    %v752 = vpop.permute.xlu0 %751
    %v754 = vadd.f32 %v694, %v752
    %v755 = vadd.f32 %v701, %v752
    %v756 = vadd.f32 %v708, %v752
    %v757 = vadd.f32 %v715, %v752
    %v758 = vadd.f32 %v722, %v752
    %v759 = vadd.f32 %v729, %v752
    %v760 = vadd.f32 %v736, %v752
    %v761 = vadd.f32 %v743, %v752
    %v762 = vtanh.pop %v754
    %v763 = vtanh.pop %v755
    %v764 = vtanh.pop %v756
    %v765 = vtanh.pop %v757
    %v766 = vtanh.pop %v758
    %v767 = vtanh.pop %v759
    %v768 = vtanh.pop %v760
    %v769 = vtanh.pop %v761
    %v770 = vpack.c.bf16 %v762, %v762
    %v771 = vpack.c.bf16 %v763, %v763
    %v772 = vpack.c.bf16 %v764, %v764
    %v773 = vpack.c.bf16 %v765, %v765
    %v774 = vpack.c.bf16 %v766, %v766
    %v775 = vpack.c.bf16 %v767, %v767
    %v776 = vpack.c.bf16 %v768, %v768
    %v777 = vpack.c.bf16 %v769, %v769
    %v778 = vld [vmem:[%s7] sm:$0xf]
    %v779 = vld [vmem:[%s7 + $0x4] sm:$0xf]
    %v780 = vld [vmem:[%s7 + $0x8] sm:$0xf]
    %v781 = vld [vmem:[%s7 + $0xc] sm:$0xf]
    %v782 = vld [vmem:[%s8] sm:$0x1]
    %v784 = vlaneseq
    %v785 = vshrl.u32 %v784, 7
    %v786 = vsub.s32 0, %v785
    %v787 = vrot.slane %v782, %v786
    %v797 = vunpack.c.l.b16 %v770
    %v798 = vunpack.c.l.b16 %v771
    %v799 = vunpack.c.l.b16 %v772
    %v800 = vunpack.c.l.b16 %v773
    %v801 = vunpack.c.l.b16 %v774
    %v802 = vunpack.c.l.b16 %v775
    %v803 = vunpack.c.l.b16 %v776
    %v804 = vunpack.c.l.b16 %v777
    %vm805 = vcmask 1041409
    %v806 = vsel %vm805, %v798, %v797
    %vm807 = vcmask 1042434
    %v808 = vsel %vm807, %v799, %v806
    %vm809 = vcmask 1043459
    %v810 = vsel %vm809, %v800, %v808
    %vm811 = vcmask 1044484
    %v812 = vsel %vm811, %v801, %v810
    %vm813 = vcmask 1045509
    %v814 = vsel %vm813, %v802, %v812
    %vm815 = vcmask 1046534
    %v816 = vsel %vm815, %v803, %v814
    %vm817 = vcmask 1047559
    %v818 = vsel %vm817, %v804, %v816
    %v819 = vpack.c.b16 %v818, %v818
    %v824 = vunpack.c.l.b16 %v778
    %v825 = vunpack.c.l.b16 %v779
    %v826 = vunpack.c.l.b16 %v780
    %v827 = vunpack.c.l.b16 %v781
    %v828 = vpack.c.b16 %v825, %v824
    %v829 = vpack.c.b16 %v827, %v826
    %v833 = vsel %vm512, %v819, 0
    %835 = vmatprep.subr.bf16.mxu0 0
    %836 = vmatpush1.bf16.msra.mxu0 %v828
    %837 = vmatprep.subr.bf16.mxu0 0
    %838 = vmatpush1.bf16.msra.mxu0 %v829
    %839 = vmatprep.subr.bf16.mxu0 0
    %840 = vmatpush1.bf16.msra.mxu0 0
    %841 = vmatprep.subr.bf16.mxu0 0
    %842 = vmatpush1.bf16.msra.mxu0 0
    %843 = vmatprep.subr.bf16.mxu0 0
    %844 = vmatpush1.bf16.msra.mxu0 0
    %845 = vmatprep.subr.bf16.mxu0 0
    %846 = vmatpush1.bf16.msra.mxu0 0
    %847 = vmatprep.subr.bf16.mxu0 0
    %848 = vmatpush1.bf16.msra.mxu0 0
    %849 = vmatprep.subr.bf16.mxu0 0
    %850 = vmatpush1.bf16.msra.mxu0 0
    %851 = vmatprep.subr.bf16.mxu0 0
    %852 = vmatpush1.bf16.msra.mxu0 0
    %853 = vmatprep.subr.bf16.mxu0 0
    %854 = vmatpush1.bf16.msra.mxu0 0
    %855 = vmatprep.subr.bf16.mxu0 0
    %856 = vmatpush1.bf16.msra.mxu0 0
    %857 = vmatprep.subr.bf16.mxu0 0
    %858 = vmatpush1.bf16.msra.mxu0 0
    %859 = vmatprep.subr.bf16.mxu0 0
    %860 = vmatpush1.bf16.msra.mxu0 0
    %861 = vmatprep.subr.bf16.mxu0 0
    %862 = vmatpush1.bf16.msra.mxu0 0
    %863 = vmatprep.subr.bf16.mxu0 0
    %864 = vmatpush1.bf16.msra.mxu0 0
    %865 = vmatprep.subr.bf16.mxu0 0
    %866 = vmatpush1.bf16.msra.mxu0 0
    %867 = vmatprep.mubr.bf16.mxu0 0
    %868 = vmatmul.mubr.bf16.gmra.mrb[0].mxu0 %v833
    %v869 = vpop.f32.mrb[0].mxu0
    %v870 = vadd.f32 %v787, %v869
    %v871 = vpop.f32.mrb[0].mxu0
    %v872 = vpop.f32.mrb[0].mxu0
    %v873 = vpop.f32.mrb[0].mxu0
    %874 = vdwg.mxu0
    %v875 = vmax.f32 %v870, 0.0
    %v876 = vpack.c.bf16 %v875, %v875
    %v877 = vld [vmem:[%s9] sm:$0xf]
    %v878 = vld [vmem:[%s9 + $0x4] sm:$0xf]
    %v879 = vld [vmem:[%s9 + $0x8] sm:$0xf]
    %v880 = vld [vmem:[%s9 + $0xc] sm:$0xf]
    %v881 = vld [vmem:[%s10] sm:$0x1]
    %v883 = vlaneseq
    %v884 = vshrl.u32 %v883, 7
    %v885 = vsub.s32 0, %v884
    %v886 = vrot.slane %v881, %v885
    %v892 = vunpack.c.l.b16 %v877
    %v893 = vunpack.c.l.b16 %v878
    %v894 = vunpack.c.l.b16 %v879
    %v895 = vunpack.c.l.b16 %v880
    %v896 = vpack.c.b16 %v893, %v892
    %v897 = vpack.c.b16 %v895, %v894
    %v901 = vsel %vm512, %v876, 0
    %903 = vmatprep.subr.bf16.mxu0 0
    %904 = vmatpush1.bf16.msra.mxu0 %v896
    %905 = vmatprep.subr.bf16.mxu0 0
    %906 = vmatpush1.bf16.msra.mxu0 %v897
    %907 = vmatprep.subr.bf16.mxu0 0
    %908 = vmatpush1.bf16.msra.mxu0 0
    %909 = vmatprep.subr.bf16.mxu0 0
    %910 = vmatpush1.bf16.msra.mxu0 0
    %911 = vmatprep.subr.bf16.mxu0 0
    %912 = vmatpush1.bf16.msra.mxu0 0
    %913 = vmatprep.subr.bf16.mxu0 0
    %914 = vmatpush1.bf16.msra.mxu0 0
    %915 = vmatprep.subr.bf16.mxu0 0
    %916 = vmatpush1.bf16.msra.mxu0 0
    %917 = vmatprep.subr.bf16.mxu0 0
    %918 = vmatpush1.bf16.msra.mxu0 0
    %919 = vmatprep.subr.bf16.mxu0 0
    %920 = vmatpush1.bf16.msra.mxu0 0
    %921 = vmatprep.subr.bf16.mxu0 0
    %922 = vmatpush1.bf16.msra.mxu0 0
    %923 = vmatprep.subr.bf16.mxu0 0
    %924 = vmatpush1.bf16.msra.mxu0 0
    %925 = vmatprep.subr.bf16.mxu0 0
    %926 = vmatpush1.bf16.msra.mxu0 0
    %927 = vmatprep.subr.bf16.mxu0 0
    %928 = vmatpush1.bf16.msra.mxu0 0
    %929 = vmatprep.subr.bf16.mxu0 0
    %930 = vmatpush1.bf16.msra.mxu0 0
    %931 = vmatprep.subr.bf16.mxu0 0
    %932 = vmatpush1.bf16.msra.mxu0 0
    %933 = vmatprep.subr.bf16.mxu0 0
    %934 = vmatpush1.bf16.msra.mxu0 0
    %935 = vmatprep.mubr.bf16.mxu0 0
    %936 = vmatmul.mubr.bf16.gmra.mrb[0].mxu0 %v901
    %v937 = vpop.f32.mrb[0].mxu0
    %v938 = vadd.f32 %v886, %v937
    %v939 = vpop.f32.mrb[0].mxu0
    %v940 = vpop.f32.mrb[0].mxu0
    %v941 = vpop.f32.mrb[0].mxu0
    %942 = vdwg.mxu0
    %943 = vst.msk [vmem:[#allocation3] sm:$0xff] %vm512, %v938
    // Predicated region
    $region46: #{tpu_custom_call.1} parent=1 // pred_check
      _
    $region47: #{tpu_custom_call.1} parent=1 // pred_check_branch
      %945 = sbr.rel (0) target = $region49
    $region48: #{tpu_custom_call.1} parent=1 // pred_region
      %s947 = ssub.s32 128, 128
      %948 = vsyncadd [#allocation4], %s947
      %s950 = sshll.u32 [#allocation3], 4
      %s951 = int_to_ptr.vmem [resolvable:$true] %s950
      %953 = dma.vmem_to_hbm [thread:$0]  %s951, 128, %s11, [#allocation4]
    $region49: #{tpu_custom_call.1} parent=1 // pred_fallthru
      _
    // Predicated region
    $region50: #{tpu_custom_call.1} parent=1 // pred_check
      _
    $region51: #{tpu_custom_call.1} parent=1 // pred_check_branch
      %955 = sbr.rel (0) target = $region53
    $region52: #{tpu_custom_call.1} parent=1 // pred_region
      %956 = dma.done [#allocation4], 128
    $region53: #{tpu_custom_call.1} parent=1 // pred_fallthru
      _
    %957 = vsyncpa [#allocation4], 1

</llo_original>
